<compile_context>
chip_gen: v7x
topology: tpu7x:2x2x1
jax: 0.10.0
libtpu: 0.0.40
codegen_flags: <defaults>
</compile_context>

<pallas_src>
import functools

import jax
import jax.numpy as jnp
from jax.experimental import pallas as pl
from jax.experimental.pallas import tpu as pltpu


# -----------------------------------------------------------------------------
# Pallas kernels: fused  Y = act(X @ Wscaled + bias [+ residual])
# (BN scale is pre-folded into W in the wrapper; accumulate in f32 VMEM.)
# -----------------------------------------------------------------------------
def _matmul_epilogue_kernel(x_ref, w_ref, bias_ref, o_ref, acc_ref, *, relu):
    k = pl.program_id(2)

    @pl.when(k == 0)
    def _():
        acc_ref[...] = jnp.zeros_like(acc_ref)

    acc_ref[...] += jnp.dot(x_ref[...], w_ref[...],
                            preferred_element_type=jnp.float32)

    @pl.when(k == pl.num_programs(2) - 1)
    def _():
        y = acc_ref[...] + bias_ref[...]
        if relu:
            y = jnp.maximum(y, 0.0)
        o_ref[...] = y.astype(o_ref.dtype)


def _matmul_res_epilogue_kernel(x_ref, w_ref, bias_ref, res_ref, o_ref,
                                acc_ref, *, relu):
    k = pl.program_id(2)

    @pl.when(k == 0)
    def _():
        acc_ref[...] = jnp.zeros_like(acc_ref)

    acc_ref[...] += jnp.dot(x_ref[...], w_ref[...],
                            preferred_element_type=jnp.float32)

    @pl.when(k == pl.num_programs(2) - 1)
    def _():
        y = acc_ref[...] + bias_ref[...] + res_ref[...].astype(jnp.float32)
        if relu:
            y = jnp.maximum(y, 0.0)
        o_ref[...] = y.astype(o_ref.dtype)


# -----------------------------------------------------------------------------
# Tiling / padding helpers
# -----------------------------------------------------------------------------
def _round_up(x, m):
    return (x + m - 1) // m * m


def _m_tiling(m, max_tile=256):
    """M (row) tile: full-dim block when small, else 256-row tiles (pad M)."""
    if m <= max_tile:
        return m, m
    return max_tile, _round_up(m, max_tile)


def _nk_tiling(dim, max_tile):
    """N/K tile: full-dim block when small, else 128-multiple tile dividing
    the 128-padded dim (largest <= max_tile)."""
    if dim <= max_tile:
        return dim, dim
    padded = _round_up(dim, 128)
    t = max_tile
    while padded % t != 0:
        t -= 128
    return t, padded


def _pad2(a, shape):
    pads = [(0, t - s) for s, t in zip(a.shape, shape)]
    if all(p == (0, 0) for p in pads):
        return a
    return jnp.pad(a, pads)


# -----------------------------------------------------------------------------
# Pallas call wrapper
# -----------------------------------------------------------------------------
def matmul_bias_act(x, w, bias, *, relu, residual=None,
                    out_dtype=jnp.bfloat16):
    """act(x @ w + bias [+ residual]) with bf16 operands, f32 accumulation."""
    m, k = x.shape
    k2, n = w.shape
    assert k == k2

    tm, m_pad = _m_tiling(m, 256)
    tn, n_pad = _nk_tiling(n, 512)
    tk, k_pad = _nk_tiling(k, 1024)

    xb = _pad2(x.astype(jnp.bfloat16), (m_pad, k_pad))
    wb = _pad2(w.astype(jnp.bfloat16), (k_pad, n_pad))
    bb = _pad2(bias.reshape(1, n).astype(jnp.float32), (1, n_pad))

    in_specs = [
        pl.BlockSpec((tm, tk), lambda i, j, kk: (i, kk)),
        pl.BlockSpec((tk, tn), lambda i, j, kk: (kk, j)),
        pl.BlockSpec((1, tn), lambda i, j, kk: (0, j)),
    ]
    args = [xb, wb, bb]

    out_bytes = jnp.dtype(out_dtype).itemsize
    bytes_accessed = (m_pad * k_pad * 2 + k_pad * n_pad * 2
                      + m_pad * n_pad * out_bytes)

    if residual is None:
        kernel = functools.partial(_matmul_epilogue_kernel, relu=relu)
    else:
        kernel = functools.partial(_matmul_res_epilogue_kernel, relu=relu)
        rb = _pad2(residual.astype(jnp.bfloat16), (m_pad, n_pad))
        in_specs.append(pl.BlockSpec((tm, tn), lambda i, j, kk: (i, j)))
        args.append(rb)
        bytes_accessed += m_pad * n_pad * 2

    grid = (m_pad // tm, n_pad // tn, k_pad // tk)

    out = pl.pallas_call(
        kernel,
        out_shape=jax.ShapeDtypeStruct((m_pad, n_pad), out_dtype),
        grid_spec=pltpu.PrefetchScalarGridSpec(
            num_scalar_prefetch=0,
            grid=grid,
            in_specs=in_specs,
            out_specs=pl.BlockSpec((tm, tn), lambda i, j, kk: (i, j)),
            scratch_shapes=[pltpu.VMEM((tm, tn), jnp.float32)],
        ),
        compiler_params=pltpu.CompilerParams(
            dimension_semantics=("parallel", "parallel", "arbitrary"),
            vmem_limit_bytes=32 * 1024 * 1024),
        cost_estimate=pl.CostEstimate(
            flops=2 * m_pad * n_pad * k_pad,
            transcendentals=0,
            bytes_accessed=bytes_accessed),
    )(*args)

    if (m_pad, n_pad) != (m, n):
        out = out[:m, :n]
    return out


# -----------------------------------------------------------------------------
# Conv wrappers (glue: layout conversion / im2col; compute stays in Pallas)
# -----------------------------------------------------------------------------
def conv1x1_bn_pallas(x_nhwc, weight_oihw, scale, bias, *, stride=1, relu=True,
                      residual_nhwc=None, out_dtype=jnp.bfloat16):
    if stride > 1:
        x_nhwc = x_nhwc[:, ::stride, ::stride, :]
    n, h, w, cin = x_nhwc.shape
    cout = weight_oihw.shape[0]
    xm = x_nhwc.reshape(n * h * w, cin)
    # Fold BN scale into the weight (f32), leaving only bias in the epilogue.
    wm = weight_oihw[:, :, 0, 0].T * scale[None, :]          # (cin, cout)
    res = None
    if residual_nhwc is not None:
        res = residual_nhwc.reshape(n * h * w, cout)
    y = matmul_bias_act(xm, wm, bias, relu=relu, residual=res,
                        out_dtype=out_dtype)
    return y.reshape(n, h, w, cout)


def _im2col_3x3(x_nhwc, stride):
    n, h, w, c = x_nhwc.shape
    xp = jnp.pad(x_nhwc, ((0, 0), (1, 1), (1, 1), (0, 0)))
    ho = (h + 2 - 3) // stride + 1
    wo = (w + 2 - 3) // stride + 1
    taps = []
    for kh in range(3):
        for kw in range(3):
            taps.append(xp[:,
                           kh:kh + (ho - 1) * stride + 1:stride,
                           kw:kw + (wo - 1) * stride + 1:stride, :])
    patches = jnp.concatenate(taps, axis=-1)  # (n, ho, wo, 9*c), order (kh,kw,c)
    return patches, ho, wo


def conv3x3_bn_relu_pallas(x_nhwc, weight_oihw, scale, bias, *, stride=1,
                           groups=1, out_dtype=jnp.bfloat16):
    # Materialize im2col patches in bf16 (half the HBM traffic of f32).
    x_nhwc = x_nhwc.astype(jnp.bfloat16)
    n, h, w, cin = x_nhwc.shape
    cout = weight_oihw.shape[0]
    cg_in = cin // groups
    cg_out = cout // groups
    outs = []
    for g in range(groups):
        xg = x_nhwc[..., g * cg_in:(g + 1) * cg_in]
        patches, ho, wo = _im2col_3x3(xg, stride)
        xm = patches.reshape(n * ho * wo, 9 * cg_in)
        wg = weight_oihw[g * cg_out:(g + 1) * cg_out]          # (cg_out, cg_in, 3, 3)
        wm = jnp.transpose(wg, (2, 3, 1, 0)).reshape(9 * cg_in, cg_out)
        wm = wm * scale[g * cg_out:(g + 1) * cg_out][None, :]  # fold BN scale
        yg = matmul_bias_act(xm, wm,
                             bias[g * cg_out:(g + 1) * cg_out],
                             relu=True, out_dtype=out_dtype)
        outs.append(yg.reshape(n, ho, wo, cg_out))
    return jnp.concatenate(outs, axis=-1) if groups > 1 else outs[0]


# -----------------------------------------------------------------------------
# BottleneckBlock
# -----------------------------------------------------------------------------
EXPANSION = 4
BN_EPS = 1e-5


def _fold_bn(gamma, beta, mean, var):
    scale = gamma / jnp.sqrt(var + BN_EPS)
    bias = beta - mean * scale
    return scale, bias


def init_bottleneck_params(key, in_feature, planes, stride=1, groups=1,
                           width_per_group=64):
    coeff = planes // 64
    width = coeff * width_per_group * groups
    out_feature = planes * EXPANSION

    def conv_w(k, cout, cin, ksize):
        return 0.05 * jax.random.normal(k, (cout, cin, ksize, ksize), jnp.float32)

    def bn_params(k, c):
        k1, k2, k3, k4 = jax.random.split(k, 4)
        gamma = 1.0 + 0.1 * jax.random.normal(k1, (c,), jnp.float32)
        beta = 0.1 * jax.random.normal(k2, (c,), jnp.float32)
        mean = 0.1 * jax.random.normal(k3, (c,), jnp.float32)
        var = jax.random.uniform(k4, (c,), jnp.float32, 0.5, 1.5)
        return _fold_bn(gamma, beta, mean, var)

    ks = jax.random.split(key, 8)
    params = {
        "w1": conv_w(ks[0], width, in_feature, 1),
        "bn1": bn_params(ks[1], width),
        "w2": conv_w(ks[2], width, width // groups, 3),
        "bn2": bn_params(ks[3], width),
        "w3": conv_w(ks[4], out_feature, width, 1),
        "bn3": bn_params(ks[5], out_feature),
        "has_shortcut": (stride != 1 or in_feature != out_feature),
    }
    if params["has_shortcut"]:
        params["w_sc"] = conv_w(ks[6], out_feature, in_feature, 1)
        params["bn_sc"] = bn_params(ks[7], out_feature)
    return params


def bottleneck_forward_pallas(x_nchw, params, *, stride=1, groups=1):
    x = jnp.transpose(x_nchw, (0, 2, 3, 1))  # NCHW -> NHWC

    s1, b1 = params["bn1"]
    s2, b2 = params["bn2"]
    s3, b3 = params["bn3"]

    # Intermediate activations and the residual stream stay in bf16.
    y = conv1x1_bn_pallas(x, params["w1"], s1, b1, stride=1, relu=True,
                          out_dtype=jnp.bfloat16)
    y = conv3x3_bn_relu_pallas(y, params["w2"], s2, b2, stride=stride,
                               groups=groups, out_dtype=jnp.bfloat16)

    if params["has_shortcut"]:
        ssc, bsc = params["bn_sc"]
        shortcut = conv1x1_bn_pallas(x, params["w_sc"], ssc, bsc,
                                     stride=stride, relu=False,
                                     out_dtype=jnp.bfloat16)
    else:
        shortcut = x.astype(jnp.bfloat16)

    # conv3 (1x1 + BN) fused with residual add + final ReLU; f32 output.
    out = conv1x1_bn_pallas(y, params["w3"], s3, b3, stride=1, relu=True,
                            residual_nhwc=shortcut, out_dtype=jnp.float32)
    return jnp.transpose(out, (0, 3, 1, 2))  # NHWC -> NCHW


# -----------------------------------------------------------------------------
# Pure-JAX reference (lax convs, f32) for correctness check
# -----------------------------------------------------------------------------
def _ref_conv_bn(x, w, scale, bias, *, stride, padding, groups=1, relu=True):
    y = jax.lax.conv_general_dilated(
        x, w, (stride, stride), padding, feature_group_count=groups,
        dimension_numbers=("NCHW", "OIHW", "NCHW"))
    y = y * scale[None, :, None, None] + bias[None, :, None, None]
    return jnp.maximum(y, 0.0) if relu else y


def bottleneck_forward_ref(x, params, *, stride=1, groups=1):
    s1, b1 = params["bn1"]
    s2, b2 = params["bn2"]
    s3, b3 = params["bn3"]
    y = _ref_conv_bn(x, params["w1"], s1, b1, stride=1, padding="VALID")
    y = _ref_conv_bn(y, params["w2"], s2, b2, stride=stride,
                     padding=((1, 1), (1, 1)), groups=groups)
    y = _ref_conv_bn(y, params["w3"], s3, b3, stride=1, padding="VALID",
                     relu=False)
    if params["has_shortcut"]:
        ssc, bsc = params["bn_sc"]
        sc = _ref_conv_bn(x, params["w_sc"], ssc, bsc, stride=stride,
                          padding="VALID", relu=False)
    else:
        sc = x
    return jnp.maximum(y + sc, 0.0)


# -----------------------------------------------------------------------------
if __name__ == "__main__":
    # Small config consistent with the module: planes must be a multiple of 64
    # (width = planes//64 * width_per_group * groups).
    batch, in_feature, planes, spatial = 2, 64, 64, 8
    stride, groups, width_per_group = 1, 1, 64

    key = jax.random.PRNGKey(0)
    kx, kp = jax.random.split(key)
    x = jax.random.normal(kx, (batch, in_feature, spatial, spatial),
                          jnp.float32)
    params = init_bottleneck_params(kp, in_feature, planes, stride=stride,
                                    groups=groups,
                                    width_per_group=width_per_group)

    out = bottleneck_forward_pallas(x, params, stride=stride, groups=groups)
    out = jax.block_until_ready(out)

    ref = jax.block_until_ready(
        bottleneck_forward_ref(x, params, stride=stride, groups=groups))

    assert out.shape == (batch, planes * EXPANSION, spatial // stride,
                         spatial // stride), out.shape

    # Kernel runs the matmuls with bf16 operands (f32 accumulation), so allow
    # a bf16-level tolerance vs the f32 lax-conv reference.
    max_err = float(jnp.max(jnp.abs(out - ref)))
    ref_scale = float(jnp.max(jnp.abs(ref)))
    tol = 5e-2 * max(1.0, ref_scale)
    if max_err > tol:
        raise AssertionError(f"mismatch vs reference, max_err={max_err}, tol={tol}")

    print("KERNEL_OK")
</pallas_src>

<mosaic_0001>
module attributes {stable_mosaic.version = 11 : i64} {
  func.func @_matmul_epilogue_kernel(%arg0: i32, %arg1: i32, %arg2: i32, %arg3: memref<128x64xbf16, #tpu.memory_space<vmem>>, %arg4: memref<64x64xbf16, #tpu.memory_space<vmem>>, %arg5: memref<1x64xf32, #tpu.memory_space<vmem>>, %arg6: memref<128x64xbf16, #tpu.memory_space<vmem>>, %arg7: memref<128x64xf32, #tpu.memory_space<vmem>>) attributes {dimension_semantics = [#tpu.dimension_semantics<parallel>, #tpu.dimension_semantics<parallel>, #tpu.dimension_semantics<arbitrary>], iteration_bounds = array<i64: 1, 1, 1>, scalar_prefetch = 0 : i64, scratch_operands = 1 : i64, tpu.core_type = #tpu.core_type<tc>, window_params = [{transform_indices = @transform_0, window_bounds = array<i64: 128, 64>}, {transform_indices = @transform_1, window_bounds = array<i64: 64, 64>}, {transform_indices = @transform_2, window_bounds = array<i64: 1, 64>}, {transform_indices = @transform_3, window_bounds = array<i64: 128, 64>}]} {
    %c0_i32 = arith.constant 0 : i32
    %0 = arith.cmpi eq, %arg2, %c0_i32 : i32
    %1 = arith.extui %0 : i1 to i32
    %c0_i32_0 = arith.constant 0 : i32
    %2 = arith.cmpi ne, %1, %c0_i32_0 : i32
    scf.if %2 {
      %cst_10 = arith.constant 0.000000e+00 : f32
      %12 = vector.broadcast %cst_10 : f32 to vector<128x64xf32>
      %c0_11 = arith.constant 0 : index
      %c0_12 = arith.constant 0 : index
      %13 = vector.load %arg7[%c0_11, %c0_12] : memref<128x64xf32, #tpu.memory_space<vmem>>, vector<128x64xf32>
      tpu.vector_store %arg7[%c0_11, %c0_12], %12 {strides = array<i32>} : memref<128x64xf32, #tpu.memory_space<vmem>>, vector<128x64xf32>,
    } else {
    }
    %c0 = arith.constant 0 : index
    %c0_1 = arith.constant 0 : index
    %3 = vector.load %arg7[%c0, %c0_1] : memref<128x64xf32, #tpu.memory_space<vmem>>, vector<128x64xf32>
    %c0_2 = arith.constant 0 : index
    %c0_3 = arith.constant 0 : index
    %4 = vector.load %arg3[%c0_2, %c0_3] : memref<128x64xbf16, #tpu.memory_space<vmem>>, vector<128x64xbf16>
    %c0_4 = arith.constant 0 : index
    %c0_5 = arith.constant 0 : index
    %5 = vector.load %arg4[%c0_4, %c0_5] : memref<64x64xbf16, #tpu.memory_space<vmem>>, vector<64x64xbf16>
    %cst = arith.constant dense<0.000000e+00> : vector<128x64xf32>
    %6 = tpu.matmul %4, %5, %cst {dimension_numbers = #tpu.dot_dimension_numbers<[1], [0], [0], [1], [0, 0, 1, 1], [], []>} : vector<128x64xbf16>, vector<64x64xbf16>, vector<128x64xf32> -> vector<128x64xf32>
    %7 = arith.addf %3, %6 : vector<128x64xf32>
    %c0_6 = arith.constant 0 : index
    %c0_7 = arith.constant 0 : index
    %8 = vector.load %arg7[%c0_6, %c0_7] : memref<128x64xf32, #tpu.memory_space<vmem>>, vector<128x64xf32>
    tpu.vector_store %arg7[%c0_6, %c0_7], %7 {strides = array<i32>} : memref<128x64xf32, #tpu.memory_space<vmem>>, vector<128x64xf32>,
    %c0_i32_8 = arith.constant 0 : i32
    %9 = arith.cmpi eq, %arg2, %c0_i32_8 : i32
    %10 = arith.extui %9 : i1 to i32
    %c0_i32_9 = arith.constant 0 : i32
    %11 = arith.cmpi ne, %10, %c0_i32_9 : i32
    scf.if %11 {
      %c0_10 = arith.constant 0 : index
      %c0_11 = arith.constant 0 : index
      %12 = vector.load %arg7[%c0_10, %c0_11] : memref<128x64xf32, #tpu.memory_space<vmem>>, vector<128x64xf32>
      %c0_12 = arith.constant 0 : index
      %c0_13 = arith.constant 0 : index
      %13 = vector.load %arg5[%c0_12, %c0_13] : memref<1x64xf32, #tpu.memory_space<vmem>>, vector<1x64xf32>
      %14 = vector.broadcast %13 : vector<1x64xf32> to vector<128x64xf32>
      %15 = arith.addf %12, %14 : vector<128x64xf32>
      %cst_14 = arith.constant 0.000000e+00 : f32
      %16 = vector.broadcast %cst_14 : f32 to vector<128x64xf32>
      %17 = arith.maximumf %15, %16 : vector<128x64xf32>
      %18 = arith.truncf %17 : vector<128x64xf32> to vector<128x64xbf16>
      %c0_15 = arith.constant 0 : index
      %c0_16 = arith.constant 0 : index
      %19 = vector.load %arg6[%c0_15, %c0_16] : memref<128x64xbf16, #tpu.memory_space<vmem>>, vector<128x64xbf16>
      tpu.vector_store %arg6[%c0_15, %c0_16], %18 {strides = array<i32>} : memref<128x64xbf16, #tpu.memory_space<vmem>>, vector<128x64xbf16>,
    } else {
    }
    return
  }
  func.func @transform_0(%arg0: i32, %arg1: i32, %arg2: i32) -> (i32, i32) {
    %c0_i32 = arith.constant 0 : i32
    return %arg0, %arg2 : i32, i32
  }
  func.func @transform_1(%arg0: i32, %arg1: i32, %arg2: i32) -> (i32, i32) {
    %c0_i32 = arith.constant 0 : i32
    return %arg2, %arg1 : i32, i32
  }
  func.func @transform_2(%arg0: i32, %arg1: i32, %arg2: i32) -> (i32, i32) {
    %c0_i32 = arith.constant 0 : i32
    %c0_i32_0 = arith.constant 0 : i32
    return %c0_i32, %arg1 : i32, i32
  }
  func.func @transform_3(%arg0: i32, %arg1: i32, %arg2: i32) -> (i32, i32) {
    %c0_i32 = arith.constant 0 : i32
    return %arg0, %arg1 : i32, i32
  }
}

</mosaic_0001>

<llo_original>
// kernel: tpu_custom_call.1
$region0: #{tpu_custom_call.1}
  #allocation0 [shape = 'u32[]', space=smem, size = 0x4, offset = 0x4, fixed_abs, tag = 'smem constant byte address 0x4 - core index']
  #allocation1 [shape = 'u32[144,128]{1,0:T(1,128)}', space=vmem, size = 0x12000, scoped, tag = 'internal scratch']
  #allocation2 [shape = 'f32[128,64]{1,0:T(8,128)}', space=vmem, size = 0x10000, scoped, tag = 'scratch operand']
  %s0 = inlined_call_operand.vmem [shape: bf16[128,64], index: 0, kind: input, shape index: {}]
  %s1 = inlined_call_operand.vmem [shape: bf16[64,64], index: 1, kind: input, shape index: {}]
  %s2 = inlined_call_operand.vmem [shape: f32[1,64], index: 2, kind: input, shape index: {}]
  %s3 = inlined_call_operand.vmem [shape: bf16[128,64], index: 3, kind: output, shape index: {}]
  %s4 = sld [smem:[#allocation0]]
  $region30: #{tpu_custom_call.1} parent=0
    _
  %s6 = ssub.s32 1, %s4
  %s7 = scalar_select 0, %s6, %s4
  // Predicated region
  $region2: #{tpu_custom_call.1} parent=0 // pred_check
    _
  $region3: #{tpu_custom_call.1} parent=0 // pred_check_branch
    %9 = sbr.rel (0) target = $region5
  $region4: #{tpu_custom_call.1} parent=0 // pred_region
    _
  $region5: #{tpu_custom_call.1} parent=0 // pred_fallthru
    _
  // Predicated region
  $region6: #{tpu_custom_call.1} parent=0 // pred_check
    _
  $region7: #{tpu_custom_call.1} parent=0 // pred_check_branch
    %11 = sbr.rel (0) target = $region9
  $region8: #{tpu_custom_call.1} parent=0 // pred_region
    _
  $region9: #{tpu_custom_call.1} parent=0 // pred_fallthru
    _
  // Predicated region
  $region10: #{tpu_custom_call.1} parent=0 // pred_check
    _
  $region11: #{tpu_custom_call.1} parent=0 // pred_check_branch
    %13 = sbr.rel (0) target = $region13
  $region12: #{tpu_custom_call.1} parent=0 // pred_region
    _
  $region13: #{tpu_custom_call.1} parent=0 // pred_fallthru
    _
  %p15 = scmp.eq.s32.totalorder 0, 0
  // Predicated region
  $region14: #{tpu_custom_call.1} parent=0 // pred_check
    %p16 = pneg %p15
  $region15: #{tpu_custom_call.1} parent=0 // pred_check_branch
    %18 = sbr.rel (%p16) target = $region17
  $region16: #{tpu_custom_call.1} parent=0 // pred_region
    %vm19 = vcmask 523264
    %20 = vst.msk [vmem:[#allocation2] sm:$0xff] %vm19, 0.0
    %21 = vst.msk [vmem:[#allocation2 + $0x8] sm:$0xff] %vm19, 0.0
    %22 = vst.msk [vmem:[#allocation2 + $0x10] sm:$0xff] %vm19, 0.0
    %23 = vst.msk [vmem:[#allocation2 + $0x18] sm:$0xff] %vm19, 0.0
    %24 = vst.msk [vmem:[#allocation2 + $0x20] sm:$0xff] %vm19, 0.0
    %25 = vst.msk [vmem:[#allocation2 + $0x28] sm:$0xff] %vm19, 0.0
    %26 = vst.msk [vmem:[#allocation2 + $0x30] sm:$0xff] %vm19, 0.0
    %27 = vst.msk [vmem:[#allocation2 + $0x38] sm:$0xff] %vm19, 0.0
    %28 = vst.msk [vmem:[#allocation2 + $0x40] sm:$0xff] %vm19, 0.0
    %29 = vst.msk [vmem:[#allocation2 + $0x48] sm:$0xff] %vm19, 0.0
    %30 = vst.msk [vmem:[#allocation2 + $0x50] sm:$0xff] %vm19, 0.0
    %31 = vst.msk [vmem:[#allocation2 + $0x58] sm:$0xff] %vm19, 0.0
    %32 = vst.msk [vmem:[#allocation2 + $0x60] sm:$0xff] %vm19, 0.0
    %33 = vst.msk [vmem:[#allocation2 + $0x68] sm:$0xff] %vm19, 0.0
    %34 = vst.msk [vmem:[#allocation2 + $0x70] sm:$0xff] %vm19, 0.0
    %35 = vst.msk [vmem:[#allocation2 + $0x78] sm:$0xff] %vm19, 0.0
  $region17: #{tpu_custom_call.1} parent=0 // pred_fallthru
    _
  %v36 = vld [vmem:[#allocation2] sm:$0xff]
  %v37 = vld [vmem:[#allocation2 + $0x8] sm:$0xff]
  %v38 = vld [vmem:[#allocation2 + $0x10] sm:$0xff]
  %v39 = vld [vmem:[#allocation2 + $0x18] sm:$0xff]
  %v40 = vld [vmem:[#allocation2 + $0x20] sm:$0xff]
  %v41 = vld [vmem:[#allocation2 + $0x28] sm:$0xff]
  %v42 = vld [vmem:[#allocation2 + $0x30] sm:$0xff]
  %v43 = vld [vmem:[#allocation2 + $0x38] sm:$0xff]
  %v44 = vld [vmem:[#allocation2 + $0x40] sm:$0xff]
  %v45 = vld [vmem:[#allocation2 + $0x48] sm:$0xff]
  %v46 = vld [vmem:[#allocation2 + $0x50] sm:$0xff]
  %v47 = vld [vmem:[#allocation2 + $0x58] sm:$0xff]
  %v48 = vld [vmem:[#allocation2 + $0x60] sm:$0xff]
  %v49 = vld [vmem:[#allocation2 + $0x68] sm:$0xff]
  %v50 = vld [vmem:[#allocation2 + $0x70] sm:$0xff]
  %v51 = vld [vmem:[#allocation2 + $0x78] sm:$0xff]
  %v52 = vld [vmem:[%s0] sm:$0xf]
  %v53 = vld [vmem:[%s0 + $0x4] sm:$0xf]
  %v54 = vld [vmem:[%s0 + $0x8] sm:$0xf]
  %v55 = vld [vmem:[%s0 + $0xc] sm:$0xf]
  %v56 = vld [vmem:[%s0 + $0x10] sm:$0xf]
  %v57 = vld [vmem:[%s0 + $0x14] sm:$0xf]
  %v58 = vld [vmem:[%s0 + $0x18] sm:$0xf]
  %v59 = vld [vmem:[%s0 + $0x1c] sm:$0xf]
  %v60 = vld [vmem:[%s0 + $0x20] sm:$0xf]
  %v61 = vld [vmem:[%s0 + $0x24] sm:$0xf]
  %v62 = vld [vmem:[%s0 + $0x28] sm:$0xf]
  %v63 = vld [vmem:[%s0 + $0x2c] sm:$0xf]
  %v64 = vld [vmem:[%s0 + $0x30] sm:$0xf]
  %v65 = vld [vmem:[%s0 + $0x34] sm:$0xf]
  %v66 = vld [vmem:[%s0 + $0x38] sm:$0xf]
  %v67 = vld [vmem:[%s0 + $0x3c] sm:$0xf]
  %v68 = vld [vmem:[%s1] sm:$0xf]
  %v69 = vld [vmem:[%s1 + $0x4] sm:$0xf]
  %v70 = vld [vmem:[%s1 + $0x8] sm:$0xf]
  %v71 = vld [vmem:[%s1 + $0xc] sm:$0xf]
  %v72 = vld [vmem:[%s1 + $0x10] sm:$0xf]
  %v73 = vld [vmem:[%s1 + $0x14] sm:$0xf]
  %v74 = vld [vmem:[%s1 + $0x18] sm:$0xf]
  %v75 = vld [vmem:[%s1 + $0x1c] sm:$0xf]
  %v92 = vunpack.c.l.b16 %v52
  %v93 = vunpack.c.l.b16 %v53
  %v94 = vunpack.c.l.b16 %v54
  %v95 = vunpack.c.l.b16 %v55
  %v96 = vunpack.c.l.b16 %v56
  %v97 = vunpack.c.l.b16 %v57
  %v98 = vunpack.c.l.b16 %v58
  %v99 = vunpack.c.l.b16 %v59
  %v100 = vunpack.c.l.b16 %v60
  %v101 = vunpack.c.l.b16 %v61
  %v102 = vunpack.c.l.b16 %v62
  %v103 = vunpack.c.l.b16 %v63
  %v104 = vunpack.c.l.b16 %v64
  %v105 = vunpack.c.l.b16 %v65
  %v106 = vunpack.c.l.b16 %v66
  %v107 = vunpack.c.l.b16 %v67
  %v108 = vpack.c.b16 %v93, %v92
  %v109 = vpack.c.b16 %v95, %v94
  %v110 = vpack.c.b16 %v97, %v96
  %v111 = vpack.c.b16 %v99, %v98
  %v112 = vpack.c.b16 %v101, %v100
  %v113 = vpack.c.b16 %v103, %v102
  %v114 = vpack.c.b16 %v105, %v104
  %v115 = vpack.c.b16 %v107, %v106
  %v124 = vunpack.c.l.b16 %v68
  %v125 = vunpack.c.l.b16 %v69
  %v126 = vunpack.c.l.b16 %v70
  %v127 = vunpack.c.l.b16 %v71
  %v128 = vunpack.c.l.b16 %v72
  %v129 = vunpack.c.l.b16 %v73
  %v130 = vunpack.c.l.b16 %v74
  %v131 = vunpack.c.l.b16 %v75
  %v132 = vpack.c.b16 %v125, %v124
  %v133 = vpack.c.b16 %v127, %v126
  %v134 = vpack.c.b16 %v129, %v128
  %v135 = vpack.c.b16 %v131, %v130
  %vm140 = vcmask 523264
  %v142 = vsel %vm140, %v108, 0
  %v145 = vsel %vm140, %v109, 0
  %v148 = vsel %vm140, %v110, 0
  %v151 = vsel %vm140, %v111, 0
  %v154 = vsel %vm140, %v112, 0
  %v157 = vsel %vm140, %v113, 0
  %v160 = vsel %vm140, %v114, 0
  %v163 = vsel %vm140, %v115, 0
  %165 = vmatprep.subr.bf16.mxu0 0
  %166 = vmatpush1.bf16.msra.mxu0 %v132
  %167 = vmatprep.subr.bf16.mxu0 0
  %168 = vmatpush1.bf16.msra.mxu0 %v133
  %169 = vmatprep.subr.bf16.mxu0 0
  %170 = vmatpush1.bf16.msra.mxu0 %v134
  %171 = vmatprep.subr.bf16.mxu0 0
  %172 = vmatpush1.bf16.msra.mxu0 %v135
  %173 = vmatprep.subr.bf16.mxu0 0
  %174 = vmatpush1.bf16.msra.mxu0 0
  %175 = vmatprep.subr.bf16.mxu0 0
  %176 = vmatpush1.bf16.msra.mxu0 0
  %177 = vmatprep.subr.bf16.mxu0 0
  %178 = vmatpush1.bf16.msra.mxu0 0
  %179 = vmatprep.subr.bf16.mxu0 0
  %180 = vmatpush1.bf16.msra.mxu0 0
  %181 = vmatprep.subr.bf16.mxu0 0
  %182 = vmatpush1.bf16.msra.mxu0 0
  %183 = vmatprep.subr.bf16.mxu0 0
  %184 = vmatpush1.bf16.msra.mxu0 0
  %185 = vmatprep.subr.bf16.mxu0 0
  %186 = vmatpush1.bf16.msra.mxu0 0
  %187 = vmatprep.subr.bf16.mxu0 0
  %188 = vmatpush1.bf16.msra.mxu0 0
  %189 = vmatprep.subr.bf16.mxu0 0
  %190 = vmatpush1.bf16.msra.mxu0 0
  %191 = vmatprep.subr.bf16.mxu0 0
  %192 = vmatpush1.bf16.msra.mxu0 0
  %193 = vmatprep.subr.bf16.mxu0 0
  %194 = vmatpush1.bf16.msra.mxu0 0
  %195 = vmatprep.subr.bf16.mxu0 0
  %196 = vmatpush1.bf16.msra.mxu0 0
  %197 = vmatprep.mubr.bf16.mxu0 0
  %198 = vmatmul.mubr.bf16.gmra.mrb[0].mxu0 %v142
  %v199 = vpop.f32.mrb[0].mxu0
  %v200 = vadd.f32 0.0, %v199
  %v201 = vpop.f32.mrb[0].mxu0
  %v202 = vpop.f32.mrb[0].mxu0
  %v203 = vadd.f32 0.0, %v202
  %v204 = vpop.f32.mrb[0].mxu0
  %205 = vmatprep.mubr.bf16.mxu0 0
  %206 = vmatmul.mubr.bf16.gmra.mrb[0].mxu0 %v145
  %v207 = vpop.f32.mrb[0].mxu0
  %v208 = vadd.f32 0.0, %v207
  %v209 = vpop.f32.mrb[0].mxu0
  %v210 = vpop.f32.mrb[0].mxu0
  %v211 = vadd.f32 0.0, %v210
  %v212 = vpop.f32.mrb[0].mxu0
  %213 = vmatprep.mubr.bf16.mxu0 0
  %214 = vmatmul.mubr.bf16.gmra.mrb[0].mxu0 %v148
  %v215 = vpop.f32.mrb[0].mxu0
  %v216 = vadd.f32 0.0, %v215
  %v217 = vpop.f32.mrb[0].mxu0
  %v218 = vpop.f32.mrb[0].mxu0
  %v219 = vadd.f32 0.0, %v218
  %v220 = vpop.f32.mrb[0].mxu0
  %221 = vmatprep.mubr.bf16.mxu0 0
  %222 = vmatmul.mubr.bf16.gmra.mrb[0].mxu0 %v151
  %v223 = vpop.f32.mrb[0].mxu0
  %v224 = vadd.f32 0.0, %v223
  %v225 = vpop.f32.mrb[0].mxu0
  %v226 = vpop.f32.mrb[0].mxu0
  %v227 = vadd.f32 0.0, %v226
  %v228 = vpop.f32.mrb[0].mxu0
  %229 = vmatprep.mubr.bf16.mxu0 0
  %230 = vmatmul.mubr.bf16.gmra.mrb[0].mxu0 %v154
  %v231 = vpop.f32.mrb[0].mxu0
  %v232 = vadd.f32 0.0, %v231
  %v233 = vpop.f32.mrb[0].mxu0
  %v234 = vpop.f32.mrb[0].mxu0
  %v235 = vadd.f32 0.0, %v234
  %v236 = vpop.f32.mrb[0].mxu0
  %237 = vmatprep.mubr.bf16.mxu0 0
  %238 = vmatmul.mubr.bf16.gmra.mrb[0].mxu0 %v157
  %v239 = vpop.f32.mrb[0].mxu0
  %v240 = vadd.f32 0.0, %v239
  %v241 = vpop.f32.mrb[0].mxu0
  %v242 = vpop.f32.mrb[0].mxu0
  %v243 = vadd.f32 0.0, %v242
  %v244 = vpop.f32.mrb[0].mxu0
  %245 = vmatprep.mubr.bf16.mxu0 0
  %246 = vmatmul.mubr.bf16.gmra.mrb[0].mxu0 %v160
  %v247 = vpop.f32.mrb[0].mxu0
  %v248 = vadd.f32 0.0, %v247
  %v249 = vpop.f32.mrb[0].mxu0
  %v250 = vpop.f32.mrb[0].mxu0
  %v251 = vadd.f32 0.0, %v250
  %v252 = vpop.f32.mrb[0].mxu0
  %253 = vmatprep.mubr.bf16.mxu0 0
  %254 = vmatmul.mubr.bf16.gmra.mrb[0].mxu0 %v163
  %v255 = vpop.f32.mrb[0].mxu0
  %v256 = vadd.f32 0.0, %v255
  %v257 = vpop.f32.mrb[0].mxu0
  %v258 = vpop.f32.mrb[0].mxu0
  %v259 = vadd.f32 0.0, %v258
  %v260 = vpop.f32.mrb[0].mxu0
  %261 = vdwg.mxu0
  %v262 = vadd.f32 %v36, %v200
  %v263 = vadd.f32 %v37, %v203
  %v264 = vadd.f32 %v38, %v208
  %v265 = vadd.f32 %v39, %v211
  %v266 = vadd.f32 %v40, %v216
  %v267 = vadd.f32 %v41, %v219
  %v268 = vadd.f32 %v42, %v224
  %v269 = vadd.f32 %v43, %v227
  %v270 = vadd.f32 %v44, %v232
  %v271 = vadd.f32 %v45, %v235
  %v272 = vadd.f32 %v46, %v240
  %v273 = vadd.f32 %v47, %v243
  %v274 = vadd.f32 %v48, %v248
  %v275 = vadd.f32 %v49, %v251
  %v276 = vadd.f32 %v50, %v256
  %v277 = vadd.f32 %v51, %v259
  %278 = vst.msk [vmem:[#allocation2] sm:$0xff] %vm140, %v262
  %279 = vst.msk [vmem:[#allocation2 + $0x8] sm:$0xff] %vm140, %v263
  %280 = vst.msk [vmem:[#allocation2 + $0x10] sm:$0xff] %vm140, %v264
  %281 = vst.msk [vmem:[#allocation2 + $0x18] sm:$0xff] %vm140, %v265
  %282 = vst.msk [vmem:[#allocation2 + $0x20] sm:$0xff] %vm140, %v266
  %283 = vst.msk [vmem:[#allocation2 + $0x28] sm:$0xff] %vm140, %v267
  %284 = vst.msk [vmem:[#allocation2 + $0x30] sm:$0xff] %vm140, %v268
  %285 = vst.msk [vmem:[#allocation2 + $0x38] sm:$0xff] %vm140, %v269
  %286 = vst.msk [vmem:[#allocation2 + $0x40] sm:$0xff] %vm140, %v270
  %287 = vst.msk [vmem:[#allocation2 + $0x48] sm:$0xff] %vm140, %v271
  %288 = vst.msk [vmem:[#allocation2 + $0x50] sm:$0xff] %vm140, %v272
  %289 = vst.msk [vmem:[#allocation2 + $0x58] sm:$0xff] %vm140, %v273
  %290 = vst.msk [vmem:[#allocation2 + $0x60] sm:$0xff] %vm140, %v274
  %291 = vst.msk [vmem:[#allocation2 + $0x68] sm:$0xff] %vm140, %v275
  %292 = vst.msk [vmem:[#allocation2 + $0x70] sm:$0xff] %vm140, %v276
  %293 = vst.msk [vmem:[#allocation2 + $0x78] sm:$0xff] %vm140, %v277
  // Predicated region
  $region18: #{tpu_custom_call.1} parent=0 // pred_check
    %p294 = pneg %p15
  $region19: #{tpu_custom_call.1} parent=0 // pred_check_branch
    %296 = sbr.rel (%p294) target = $region21
  $region20: #{tpu_custom_call.1} parent=0 // pred_region
    %v297 = vld [vmem:[#allocation2] sm:$0xff]
    %v298 = vld [vmem:[#allocation2 + $0x8] sm:$0xff]
    %v299 = vld [vmem:[#allocation2 + $0x10] sm:$0xff]
    %v300 = vld [vmem:[#allocation2 + $0x18] sm:$0xff]
    %v301 = vld [vmem:[#allocation2 + $0x20] sm:$0xff]
    %v302 = vld [vmem:[#allocation2 + $0x28] sm:$0xff]
    %v303 = vld [vmem:[#allocation2 + $0x30] sm:$0xff]
    %v304 = vld [vmem:[#allocation2 + $0x38] sm:$0xff]
    %v305 = vld [vmem:[#allocation2 + $0x40] sm:$0xff]
    %v306 = vld [vmem:[#allocation2 + $0x48] sm:$0xff]
    %v307 = vld [vmem:[#allocation2 + $0x50] sm:$0xff]
    %v308 = vld [vmem:[#allocation2 + $0x58] sm:$0xff]
    %v309 = vld [vmem:[#allocation2 + $0x60] sm:$0xff]
    %v310 = vld [vmem:[#allocation2 + $0x68] sm:$0xff]
    %v311 = vld [vmem:[#allocation2 + $0x70] sm:$0xff]
    %v312 = vld [vmem:[#allocation2 + $0x78] sm:$0xff]
    %v313 = vld [vmem:[%s2] sm:$0x1]
    %v315 = vlaneseq
    %v316 = vshrl.u32 %v315, 7
    %v317 = vsub.s32 0, %v316
    %v318 = vrot.slane %v313, %v317
    %v320 = vadd.f32 %v297, %v318
    %v321 = vadd.f32 %v298, %v318
    %v322 = vadd.f32 %v299, %v318
    %v323 = vadd.f32 %v300, %v318
    %v324 = vadd.f32 %v301, %v318
    %v325 = vadd.f32 %v302, %v318
    %v326 = vadd.f32 %v303, %v318
    %v327 = vadd.f32 %v304, %v318
    %v328 = vadd.f32 %v305, %v318
    %v329 = vadd.f32 %v306, %v318
    %v330 = vadd.f32 %v307, %v318
    %v331 = vadd.f32 %v308, %v318
    %v332 = vadd.f32 %v309, %v318
    %v333 = vadd.f32 %v310, %v318
    %v334 = vadd.f32 %v311, %v318
    %v335 = vadd.f32 %v312, %v318
    %v336 = vmax.f32 %v320, 0.0
    %v337 = vmax.f32 %v321, 0.0
    %v338 = vmax.f32 %v322, 0.0
    %v339 = vmax.f32 %v323, 0.0
    %v340 = vmax.f32 %v324, 0.0
    %v341 = vmax.f32 %v325, 0.0
    %v342 = vmax.f32 %v326, 0.0
    %v343 = vmax.f32 %v327, 0.0
    %v344 = vmax.f32 %v328, 0.0
    %v345 = vmax.f32 %v329, 0.0
    %v346 = vmax.f32 %v330, 0.0
    %v347 = vmax.f32 %v331, 0.0
    %v348 = vmax.f32 %v332, 0.0
    %v349 = vmax.f32 %v333, 0.0
    %v350 = vmax.f32 %v334, 0.0
    %v351 = vmax.f32 %v335, 0.0
    %v352 = vpack.c.bf16 %v337, %v336
    %v353 = vpack.c.bf16 %v339, %v338
    %v354 = vpack.c.bf16 %v341, %v340
    %v355 = vpack.c.bf16 %v343, %v342
    %v356 = vpack.c.bf16 %v345, %v344
    %v357 = vpack.c.bf16 %v347, %v346
    %v358 = vpack.c.bf16 %v349, %v348
    %v359 = vpack.c.bf16 %v351, %v350
    %v368 = vunpack.c.l.b16 %v352
    %v369 = vunpack.c.h.b16 %v352
    %v370 = vunpack.c.l.b16 %v353
    %v371 = vunpack.c.h.b16 %v353
    %v372 = vunpack.c.l.b16 %v354
    %v373 = vunpack.c.h.b16 %v354
    %v374 = vunpack.c.l.b16 %v355
    %v375 = vunpack.c.h.b16 %v355
    %v376 = vunpack.c.l.b16 %v356
    %v377 = vunpack.c.h.b16 %v356
    %v378 = vunpack.c.l.b16 %v357
    %v379 = vunpack.c.h.b16 %v357
    %v380 = vunpack.c.l.b16 %v358
    %v381 = vunpack.c.h.b16 %v358
    %v382 = vunpack.c.l.b16 %v359
    %v383 = vunpack.c.h.b16 %v359
    %v384 = vpack.c.b16 %v368, %v368
    %v385 = vpack.c.b16 %v369, %v369
    %v386 = vpack.c.b16 %v370, %v370
    %v387 = vpack.c.b16 %v371, %v371
    %v388 = vpack.c.b16 %v372, %v372
    %v389 = vpack.c.b16 %v373, %v373
    %v390 = vpack.c.b16 %v374, %v374
    %v391 = vpack.c.b16 %v375, %v375
    %v392 = vpack.c.b16 %v376, %v376
    %v393 = vpack.c.b16 %v377, %v377
    %v394 = vpack.c.b16 %v378, %v378
    %v395 = vpack.c.b16 %v379, %v379
    %v396 = vpack.c.b16 %v380, %v380
    %v397 = vpack.c.b16 %v381, %v381
    %v398 = vpack.c.b16 %v382, %v382
    %v399 = vpack.c.b16 %v383, %v383
    %vm416 = vcmask 519168
    %417 = vst.msk [vmem:[%s3] sm:$0xf] %vm416, %v384
    %418 = vst.msk [vmem:[%s3 + $0x4] sm:$0xf] %vm416, %v385
    %419 = vst.msk [vmem:[%s3 + $0x8] sm:$0xf] %vm416, %v386
    %420 = vst.msk [vmem:[%s3 + $0xc] sm:$0xf] %vm416, %v387
    %421 = vst.msk [vmem:[%s3 + $0x10] sm:$0xf] %vm416, %v388
    %422 = vst.msk [vmem:[%s3 + $0x14] sm:$0xf] %vm416, %v389
    %423 = vst.msk [vmem:[%s3 + $0x18] sm:$0xf] %vm416, %v390
    %424 = vst.msk [vmem:[%s3 + $0x1c] sm:$0xf] %vm416, %v391
    %425 = vst.msk [vmem:[%s3 + $0x20] sm:$0xf] %vm416, %v392
    %426 = vst.msk [vmem:[%s3 + $0x24] sm:$0xf] %vm416, %v393
    %427 = vst.msk [vmem:[%s3 + $0x28] sm:$0xf] %vm416, %v394
    %428 = vst.msk [vmem:[%s3 + $0x2c] sm:$0xf] %vm416, %v395
    %429 = vst.msk [vmem:[%s3 + $0x30] sm:$0xf] %vm416, %v396
    %430 = vst.msk [vmem:[%s3 + $0x34] sm:$0xf] %vm416, %v397
    %431 = vst.msk [vmem:[%s3 + $0x38] sm:$0xf] %vm416, %v398
    %432 = vst.msk [vmem:[%s3 + $0x3c] sm:$0xf] %vm416, %v399
  $region21: #{tpu_custom_call.1} parent=0 // pred_fallthru
    _
  // Predicated region
  $region22: #{tpu_custom_call.1} parent=0 // pred_check
    _
  $region23: #{tpu_custom_call.1} parent=0 // pred_check_branch
    %434 = sbr.rel (0) target = $region25
  $region24: #{tpu_custom_call.1} parent=0 // pred_region
    _
  $region25: #{tpu_custom_call.1} parent=0 // pred_fallthru
    _
  // Predicated region
  $region26: #{tpu_custom_call.1} parent=0 // pred_check
    _
  $region27: #{tpu_custom_call.1} parent=0 // pred_check_branch
    %436 = sbr.rel (0) target = $region29
  $region28: #{tpu_custom_call.1} parent=0 // pred_region
    _
  $region29: #{tpu_custom_call.1} parent=0 // pred_fallthru
    _

</llo_original>
